<compile_context>
chip_gen: v6e
topology: v6e:2x2x1
jax: 0.10.0
libtpu: 0.0.40
codegen_flags: <defaults>
</compile_context>

<pallas_src>
import functools

import jax
import jax.numpy as jnp
from jax.experimental import pallas as pl
from jax.experimental.pallas import tpu as pltpu


def _round_up(x, m):
    return (x + m - 1) // m * m


def _vmem_capacity_bytes():
    try:
        cap = getattr(pltpu.get_tpu_info(), "vmem_capacity_bytes", None)
        if cap:
            return int(cap)
    except Exception:
        pass
    return 128 * 1024 * 1024


def _divisor_multiples(n, mult):
    """Divisors of n that are multiples of `mult`; falls back to [n] (full dim)."""
    ds = [d for d in range(mult, n + 1, mult) if n % d == 0]
    return ds if ds else [n]


def _pick_tiles(B, C, HW, itemsize, budget_bytes, thw_forced=None):
    """(tb, tc, thw) exact-divisor tiles for the (B, C, HW) streaming layout.

    tb : multiple of 8 (or full B)    -- sublane dim of the pooled output block
    tc : multiple of 128 (or full C)  -- lane dim of the pooled output block
    thw: multiple of 128 (or full HW) -- lane dim of the streamed input block
    """
    b_opts = _divisor_multiples(B, 8)
    c_opts = _divisor_multiples(C, 128)
    hw_opts = [thw_forced] if thw_forced is not None else _divisor_multiples(HW, 128)
    # Keep >=2 blocks on the parallel (batch x channel) grid axes when the shape
    # allows, so v7x's second TensorCore gets work; harmless on 1-TC chips.
    if len(b_opts) > 1:
        b_opts = [d for d in b_opts if d < B] or b_opts
    elif len(c_opts) > 1:
        c_opts = [d for d in c_opts if d < C] or c_opts

    best = None
    for tb in b_opts:
        for tc in c_opts:
            for thw in hw_opts:
                if tb * tc * thw * itemsize <= budget_bytes:
                    cand = (thw, tc, tb)     # prefer wide lanes, then dense output
                    if best is None or cand > best:
                        best = cand
    if best is None:
        # Even the smallest legal block exceeds the budget (only for enormous HW
        # with no 128-multiple divisor): take the smallest legal block anyway.
        return b_opts[0], c_opts[0], min(hw_opts)
    thw, tc, tb = best
    return tb, tc, thw


def _pick_class_tile(ncls_pad, max_tile=2048):
    best = 128
    t = 128
    while t <= min(ncls_pad, max_tile):
        if ncls_pad % t == 0:
            best = t
        t += 128
    return best


# ------------------------ Phase 1: gap(x) + gmp(x) ---------------------------

def _pool_kernel(x_ref, pooled_ref, max_sc, *, inv_hw):
    # x_ref: (TB, TC, THW) block of the NCHW feature map flattened to (B, C, HW);
    # HW sits on the lane axis and is reduced in-kernel (XLU slot is free in a
    # mem-bound stream). The running sum lives directly in the resident output
    # block; only the running max needs a scratch.
    s = pl.program_id(2)

    @pl.when(s == 0)
    def _():
        pooled_ref[...] = jnp.zeros_like(pooled_ref)
        max_sc[...] = jnp.full_like(max_sc, -jnp.inf)

    xb = x_ref[...].astype(jnp.float32)              # accumulate in f32
    pooled_ref[...] += jnp.sum(xb, axis=2)           # running sum  -> (TB, TC)
    max_sc[...] = jnp.maximum(max_sc[...], jnp.max(xb, axis=2))

    @pl.when(s == pl.num_programs(2) - 1)
    def _():
        pooled_ref[...] = pooled_ref[...] * inv_hw + max_sc[...]


def global_pool(x_nchw, *, hw_tile=None, budget_bytes=None):
    """AdaptiveAvgPool2d(1)(x) + AdaptiveMaxPool2d(1)(x), flattened to (B, C) f32."""
    B, C, H, W = x_nchw.shape
    HW = H * W
    if hw_tile is not None and (HW % hw_tile != 0
                                or (hw_tile != HW and hw_tile % 128 != 0)):
        raise ValueError("hw_tile must divide H*W and be a multiple of 128 "
                         "(or equal to the full spatial extent)")

    x = x_nchw.reshape(B, C, HW)      # contiguous reshape: no transpose, no copy
    itemsize = jnp.dtype(x.dtype).itemsize

    vmem_cap = _vmem_capacity_bytes()
    if budget_bytes is None:
        # Generation-aware per-block budget (the input block is double-buffered).
        budget_bytes = (16 << 20) if vmem_cap >= (96 << 20) else (10 << 20)
    tb, tc, thw = _pick_tiles(B, C, HW, itemsize, budget_bytes, thw_forced=hw_tile)
    nb, nc, ns = B // tb, C // tc, HW // thw
    assert nb * tb == B and nc * tc == C and ns * thw == HW

    in_block = tb * tc * thw * itemsize
    small = tb * tc * 4                          # f32 output block / max scratch
    need = 2 * in_block + 2 * small + small      # dbl-buffered input + output + scratch
    vmem_limit = int(min(vmem_cap - (8 << 20), max(need + (8 << 20), 32 << 20)))

    return pl.pallas_call(
        functools.partial(_pool_kernel, inv_hw=1.0 / HW),
        out_shape=jax.ShapeDtypeStruct((B, C), jnp.float32),
        grid=(nb, nc, ns),
        in_specs=[pl.BlockSpec((tb, tc, thw), lambda b, c, s: (b, c, s))],
        out_specs=pl.BlockSpec((tb, tc), lambda b, c, s: (b, c)),
        scratch_shapes=[pltpu.VMEM((tb, tc), jnp.float32)],
        compiler_params=pltpu.CompilerParams(
            dimension_semantics=("parallel", "parallel", "arbitrary"),
            vmem_limit_bytes=vmem_limit),
    )(x)


# ---------------- Phase 2a: fcneck Linear + BatchNorm1d (training) -----------

def _neck_bn_kernel(pooled_ref, w1_ref, gamma_ref, beta_ref, feat_ref):
    # bf16 MXU operands, f32 accumulation; BN (biased batch stats) kept in f32.
    neck = jnp.dot(pooled_ref[...].astype(jnp.bfloat16), w1_ref[...],
                   preferred_element_type=jnp.float32)
    mean = jnp.mean(neck, axis=0, keepdims=True)
    var = jnp.mean((neck - mean) ** 2, axis=0, keepdims=True)
    bn = (neck - mean) * jax.lax.rsqrt(var + 1e-5)
    feat_ref[...] = bn * gamma_ref[...] + beta_ref[...]


# ---------------- Phase 2b: classifier, tiled over the class dim -------------

def _classifier_kernel(feat_ref, w2_ref, cls_ref):
    cls_ref[...] = jnp.dot(feat_ref[...].astype(jnp.bfloat16), w2_ref[...],
                           preferred_element_type=jnp.float32)


# ------------------------------ Parameter prep -------------------------------

def prepare_head_params(w_fcneck, bn_gamma, bn_beta, w_classifier):
    """Pad / transpose / cast once into the kernel-native layout (hoisted out of
    the forward path so it is not re-done every step)."""
    neck_planes, in_planes = w_fcneck.shape
    num_classes = w_classifier.shape[0]
    neck_pad = _round_up(neck_planes, 128)
    ncls_pad = _round_up(num_classes, 128)
    w1p = jnp.zeros((in_planes, neck_pad), jnp.bfloat16).at[:, :neck_planes].set(
        w_fcneck.T.astype(jnp.bfloat16))
    gammap = jnp.zeros((1, neck_pad), jnp.float32).at[:, :neck_planes].set(
        bn_gamma.reshape(1, -1).astype(jnp.float32))
    betap = jnp.zeros((1, neck_pad), jnp.float32).at[:, :neck_planes].set(
        bn_beta.reshape(1, -1).astype(jnp.float32))
    w2p = jnp.zeros((neck_pad, ncls_pad), jnp.bfloat16).at[
        :neck_planes, :num_classes].set(w_classifier.T.astype(jnp.bfloat16))
    return {"w1p": w1p, "gammap": gammap, "betap": betap, "w2p": w2p,
            "neck_planes": neck_planes, "num_classes": num_classes}


# --------------------------------- Forward -----------------------------------

def backbone_forward(x_feat_nchw, head, *, hw_tile=None):
    """x_feat_nchw: (B, C, H, W) base(x) feature map. Returns (cls_score, global_feat)."""
    B, C = x_feat_nchw.shape[0], x_feat_nchw.shape[1]
    w1p, gammap, betap, w2p = head["w1p"], head["gammap"], head["betap"], head["w2p"]
    assert w1p.shape[0] == C, "fcneck in_planes must match the feature-map channels"
    neck_pad = w1p.shape[1]
    ncls_pad = w2p.shape[1]

    # Phase 1: streamed pooling (mem-bound).
    pooled = global_pool(x_feat_nchw, hw_tile=hw_tile)            # (B, C) f32

    # Phase 2a: neck + BN (tiny; full batch in one block so BN statistics are exact).
    feat_p = pl.pallas_call(
        _neck_bn_kernel,
        out_shape=jax.ShapeDtypeStruct((B, neck_pad), jnp.float32),
        grid=(1,),
        in_specs=[pl.BlockSpec((B, C), lambda i: (0, 0)),
                  pl.BlockSpec((C, neck_pad), lambda i: (0, 0)),
                  pl.BlockSpec((1, neck_pad), lambda i: (0, 0)),
                  pl.BlockSpec((1, neck_pad), lambda i: (0, 0))],
        out_specs=pl.BlockSpec((B, neck_pad), lambda i: (0, 0)),
        compiler_params=pltpu.CompilerParams(dimension_semantics=("arbitrary",)),
    )(pooled, w1p, gammap, betap)

    # Phase 2b: classifier tiled over the class dimension (parallel axis): bounded
    # VMEM for large num_classes, pipelined bf16 w2 stream, megacore-shardable.
    tn = _pick_class_tile(ncls_pad)
    cls_p = pl.pallas_call(
        _classifier_kernel,
        out_shape=jax.ShapeDtypeStruct((B, ncls_pad), jnp.float32),
        grid=(ncls_pad // tn,),
        in_specs=[pl.BlockSpec((B, neck_pad), lambda j: (0, 0)),
                  pl.BlockSpec((neck_pad, tn), lambda j: (0, j))],
        out_specs=pl.BlockSpec((B, tn), lambda j: (0, j)),
        compiler_params=pltpu.CompilerParams(dimension_semantics=("parallel",)),
    )(feat_p, w2p)

    cls_score = cls_p[:, :head["num_classes"]]
    global_feat = feat_p[:, :head["neck_planes"]]
    return cls_score, global_feat


def init_params(key, in_planes, neck_planes, num_classes):
    k1, k2 = jax.random.split(key)
    # fcneck: xavier_uniform_ (weights_init_xavier), PyTorch layout (out, in)
    bound = (6.0 / (in_planes + neck_planes)) ** 0.5
    w_fcneck = jax.random.uniform(k1, (neck_planes, in_planes),
                                  minval=-bound, maxval=bound, dtype=jnp.float32)
    # fcneck_bn: weights_init_kaiming -> weight=1, bias=0
    bn_gamma = jnp.ones((neck_planes,), jnp.float32)
    bn_beta = jnp.zeros((neck_planes,), jnp.float32)
    # classifier: weights_init_classifier -> normal(std=0.001), no bias
    w_classifier = 0.001 * jax.random.normal(k2, (num_classes, neck_planes),
                                             dtype=jnp.float32)
    return w_fcneck, bn_gamma, bn_beta, w_classifier


if __name__ == "__main__":
    key = jax.random.PRNGKey(0)
    B, C, H, W = 2, 64, 16, 16     # C == self.in_planes of the base (small synthetic size)
    NECK, NUM_CLASSES = 32, 16

    kx, kp = jax.random.split(key)
    x = jax.random.normal(kx, (B, C, H, W), dtype=jnp.float32)   # base(x) feature map, NCHW
    w_fcneck, bn_gamma, bn_beta, w_classifier = init_params(kp, C, NECK, NUM_CLASSES)
    head = prepare_head_params(w_fcneck, bn_gamma, bn_beta, w_classifier)

    # hw_tile=128 forces a 2-step spatial reduction so the accumulator path is exercised.
    cls_score, global_feat = backbone_forward(x, head, hw_tile=128)
    jax.block_until_ready((cls_score, global_feat))

    # ---- correctness checks ----
    # 1) pooling kernel vs analytic gap + gmp
    pooled_k = global_pool(x, hw_tile=128)
    pooled_a = jnp.mean(x, axis=(2, 3)) + jnp.max(x, axis=(2, 3))
    assert jnp.allclose(pooled_k, pooled_a, atol=1e-4, rtol=1e-5), "pooled mismatch"

    # 2) head kernels vs pure-JAX reference on the same pooled features
    #    (operands quantized to bf16 exactly as the kernels see them).
    def q(a):
        return a.astype(jnp.bfloat16).astype(jnp.float32)

    neck_ref = q(pooled_k) @ q(w_fcneck).T
    m = jnp.mean(neck_ref, axis=0, keepdims=True)
    v = jnp.mean((neck_ref - m) ** 2, axis=0, keepdims=True)
    feat_ref = (neck_ref - m) / jnp.sqrt(v + 1e-5) * bn_gamma + bn_beta
    cls_ref = q(feat_ref) @ q(w_classifier).T

    assert jnp.allclose(global_feat, feat_ref, atol=5e-3, rtol=5e-3), "global_feat mismatch"
    assert jnp.allclose(cls_score, cls_ref, atol=1e-3, rtol=5e-3), "cls_score mismatch"
    print("KERNEL_OK")
</pallas_src>

<mosaic_0001>
module attributes {stable_mosaic.version = 11 : i64} {
  func.func @_pool_kernel(%arg0: i32, %arg1: i32, %arg2: i32, %arg3: memref<2x64x128xf32, #tpu.memory_space<vmem>>, %arg4: memref<2x64xf32, #tpu.memory_space<vmem>>, %arg5: memref<2x64xf32, #tpu.memory_space<vmem>>) attributes {dimension_semantics = [#tpu.dimension_semantics<parallel>, #tpu.dimension_semantics<parallel>, #tpu.dimension_semantics<arbitrary>], iteration_bounds = array<i64: 1, 1, 2>, scalar_prefetch = 0 : i64, scratch_operands = 1 : i64, tpu.core_type = #tpu.core_type<tc>, window_params = [{transform_indices = @transform_0, window_bounds = array<i64: 2, 64, 128>}, {transform_indices = @transform_1, window_bounds = array<i64: 2, 64>}]} {
    %c0_i32 = arith.constant 0 : i32
    %0 = arith.cmpi eq, %arg2, %c0_i32 : i32
    %1 = arith.extui %0 : i1 to i32
    %c0_i32_0 = arith.constant 0 : i32
    %2 = arith.cmpi ne, %1, %c0_i32_0 : i32
    scf.if %2 {
      %cst_13 = arith.constant 0.000000e+00 : f32
      %15 = vector.broadcast %cst_13 : f32 to vector<2x64xf32>
      %c0_14 = arith.constant 0 : index
      %c0_15 = arith.constant 0 : index
      %16 = vector.load %arg4[%c0_14, %c0_15] : memref<2x64xf32, #tpu.memory_space<vmem>>, vector<2x64xf32>
      tpu.vector_store %arg4[%c0_14, %c0_15], %15 {strides = array<i32>} : memref<2x64xf32, #tpu.memory_space<vmem>>, vector<2x64xf32>,
      %cst_16 = arith.constant 0xFF800000 : f32
      %17 = vector.broadcast %cst_16 : f32 to vector<2x64xf32>
      %c0_17 = arith.constant 0 : index
      %c0_18 = arith.constant 0 : index
      %18 = vector.load %arg5[%c0_17, %c0_18] : memref<2x64xf32, #tpu.memory_space<vmem>>, vector<2x64xf32>
      tpu.vector_store %arg5[%c0_17, %c0_18], %17 {strides = array<i32>} : memref<2x64xf32, #tpu.memory_space<vmem>>, vector<2x64xf32>,
    } else {
    }
    %c0 = arith.constant 0 : index
    %c0_1 = arith.constant 0 : index
    %c0_2 = arith.constant 0 : index
    %3 = vector.load %arg3[%c0, %c0_1, %c0_2] : memref<2x64x128xf32, #tpu.memory_space<vmem>>, vector<2x64x128xf32>
    %c0_3 = arith.constant 0 : index
    %c0_4 = arith.constant 0 : index
    %4 = vector.load %arg4[%c0_3, %c0_4] : memref<2x64xf32, #tpu.memory_space<vmem>>, vector<2x64xf32>
    %cst = arith.constant dense<0.000000e+00> : vector<2x64xf32>
    %5 = vector.multi_reduction <add>, %3, %cst [2] : vector<2x64x128xf32> to vector<2x64xf32>
    %6 = arith.addf %4, %5 : vector<2x64xf32>
    %c0_5 = arith.constant 0 : index
    %c0_6 = arith.constant 0 : index
    %7 = vector.load %arg4[%c0_5, %c0_6] : memref<2x64xf32, #tpu.memory_space<vmem>>, vector<2x64xf32>
    tpu.vector_store %arg4[%c0_5, %c0_6], %6 {strides = array<i32>} : memref<2x64xf32, #tpu.memory_space<vmem>>, vector<2x64xf32>,
    %c0_7 = arith.constant 0 : index
    %c0_8 = arith.constant 0 : index
    %8 = vector.load %arg5[%c0_7, %c0_8] : memref<2x64xf32, #tpu.memory_space<vmem>>, vector<2x64xf32>
    %cst_9 = arith.constant dense<0xFF800000> : vector<2x64xf32>
    %9 = vector.multi_reduction <maximumf>, %3, %cst_9 [2] : vector<2x64x128xf32> to vector<2x64xf32>
    %10 = arith.maximumf %8, %9 : vector<2x64xf32>
    %c0_10 = arith.constant 0 : index
    %c0_11 = arith.constant 0 : index
    %11 = vector.load %arg5[%c0_10, %c0_11] : memref<2x64xf32, #tpu.memory_space<vmem>>, vector<2x64xf32>
    tpu.vector_store %arg5[%c0_10, %c0_11], %10 {strides = array<i32>} : memref<2x64xf32, #tpu.memory_space<vmem>>, vector<2x64xf32>,
    %c1_i32 = arith.constant 1 : i32
    %12 = arith.cmpi eq, %arg2, %c1_i32 : i32
    %13 = arith.extui %12 : i1 to i32
    %c0_i32_12 = arith.constant 0 : i32
    %14 = arith.cmpi ne, %13, %c0_i32_12 : i32
    scf.if %14 {
      %c0_13 = arith.constant 0 : index
      %c0_14 = arith.constant 0 : index
      %15 = vector.load %arg4[%c0_13, %c0_14] : memref<2x64xf32, #tpu.memory_space<vmem>>, vector<2x64xf32>
      %cst_15 = arith.constant 3.906250e-03 : f32
      %16 = vector.broadcast %cst_15 : f32 to vector<2x64xf32>
      %17 = arith.mulf %15, %16 : vector<2x64xf32>
      %c0_16 = arith.constant 0 : index
      %c0_17 = arith.constant 0 : index
      %18 = vector.load %arg5[%c0_16, %c0_17] : memref<2x64xf32, #tpu.memory_space<vmem>>, vector<2x64xf32>
      %19 = arith.addf %17, %18 : vector<2x64xf32>
      %c0_18 = arith.constant 0 : index
      %c0_19 = arith.constant 0 : index
      %20 = vector.load %arg4[%c0_18, %c0_19] : memref<2x64xf32, #tpu.memory_space<vmem>>, vector<2x64xf32>
      tpu.vector_store %arg4[%c0_18, %c0_19], %19 {strides = array<i32>} : memref<2x64xf32, #tpu.memory_space<vmem>>, vector<2x64xf32>,
    } else {
    }
    return
  }
  func.func @transform_0(%arg0: i32, %arg1: i32, %arg2: i32) -> (i32, i32, i32) {
    %c0_i32 = arith.constant 0 : i32
    return %arg0, %arg1, %arg2 : i32, i32, i32
  }
  func.func @transform_1(%arg0: i32, %arg1: i32, %arg2: i32) -> (i32, i32) {
    %c0_i32 = arith.constant 0 : i32
    return %arg0, %arg1 : i32, i32
  }
}

</mosaic_0001>

<llo_original>
// kernel: tpu_custom_call.1
$region0: #{tpu_custom_call.1}
  #allocation0 [shape = 'u32[]', space=smem, size = 0x4, offset = 0x4, fixed_abs, tag = 'smem constant byte address 0x4 - core index']
  #allocation1 [shape = 'u32[144,128]{1,0:T(1,128)}', space=vmem, size = 0x12000, scoped, tag = 'internal scratch']
  #allocation2 [shape = 'f32[2,64]{1,0:T(2,128)}', space=vmem, size = 0x400, scoped, tag = 'scratch operand']
  %s0 = inlined_call_operand.hbm [shape: f32[2,64,256], index: 0, kind: input, shape index: {}]
  %s1 = inlined_call_operand.hbm [shape: f32[2,64], index: 1, kind: output, shape index: {}]
  %s2 = sld [smem:[#allocation0]]
  $region49: #{tpu_custom_call.1} parent=0
    _
  %s4 = ssub.s32 1, %s2
  %s5 = scalar_select 0, %s4, %s2
  $region1: #{tpu_custom_call.1} parent=0
    #allocation3 [shape = 'u8[131072]{0}', space=vmem, size = 0x20000, scoped, tag = 'input window, operand 0']
    #allocation4 [shape = 's32[2]{0}', space=sflag, size = 0x8, scoped, tag = 'scoped memory for tpu_custom_call.1']
    #allocation5 [shape = 's32[2]{0}', space=sflag, size = 0x8, scoped, tag = 'scoped memory for tpu_custom_call.1']
    #allocation6 [shape = 'u8[1024]{0}', space=vmem, size = 0x400, scoped, tag = 'output window, operand 0, single buffered']
    %6 = vsyncpa [#allocation4], 0
    %s7 = scalar_lea.sflag [#allocation4], 1
    %8 = vsyncpa %s7, 0
    %9 = vsyncpa [#allocation5], 0
    loop: start=0, step=1, limit=4
    $region2: #{tpu_custom_call.1} parent=1 // loop_pre_header
      _
    $region3: #{tpu_custom_call.1} parent=1 // loop_header
      %s11 = sphi 0, %s15
      %p12 = scmp.ge.s32.totalorder %s11, 4
      %s18 = sphi 0, %s37
      %s19 = sphi 0, %s33
      %s20 = sphi 0, %s29
      %s21 = sphi 0, %s18
      %s22 = sphi 0, %s19
      %s23 = sphi 0, %s20
      %s24 = sphi 0, %s21
      %s25 = sphi 0, %s22
      %s26 = sphi 0, %s23
      %s44 = sphi 0, %s46
      %s47 = sphi 0, %s44
      %s48 = sphi 0, %s47
      %s64 = sphi 0, %s48
      %s72 = sphi 0, %s74
      %s75 = sphi 0, %s72
      %s76 = sphi 0, %s75
      %s92 = sphi 0, %s76
    $region4: #{tpu_custom_call.1} parent=1 // loop_header_branch
      %14 = sbr.rel (%p12) target = $region8
    $region5: #{tpu_custom_call.1} parent=1 // loop_body
      %s16 = ssub.s32 %s11, 1
      %s17 = ssub.s32 %s11, 2
      %s27 = sadd.s32 1, %s20
      %p28 = scmp.ge.s32.totalorder %s27, 2
      %s29 = scalar_select %p28, 0, %s27
      %s30 = sadd.s32 1, %s19
      %s31 = scalar_select %p28, %s30, %s19
      %p32 = scmp.ge.s32.totalorder %s31, 1
      %s33 = scalar_select %p32, 0, %s31
      %s34 = sadd.s32 1, %s18
      %s35 = scalar_select %p32, %s34, %s18
      %p36 = scmp.ge.s32.totalorder %s35, 1
      %s37 = scalar_select %p36, 0, %s35
      %s38 = ssub.s32 %s18, %s37
      %s39 = ssub.s32 %s19, %s33
      %s40 = sor.u32 %s38, %s39
      %s41 = ssub.s32 %s20, %s29
      %s42 = sor.u32 %s40, %s41
      %p43 = scmp.eq.s32.totalorder %s42, 0
      %s45 = sadd.s32 %s44, 1
      %s46 = scalar_select %p43, %s44, %s45
      %p49 = pneg %p43
      %p50 = scmp.eq.s32.totalorder %s11, 1
      %p51 = por %p49, %p50
      %p52 = scmp.ne.s32.totalorder %s44, %s47
      %p53 = scmp.eq.s32.totalorder %s11, 0
      %p54 = por %p52, %p53
      %p55 = scmp.ne.s32.totalorder %s44, %s47
      %p56 = scmp.eq.s32.totalorder %s16, 1
      %p57 = por %p55, %p56
      %p58 = scmp.ne.s32.totalorder %s47, %s48
      %p59 = scmp.eq.s32.totalorder %s16, 0
      %p60 = por %p58, %p59
      %p61 = scmp.ne.s32.totalorder %s47, %s48
      %p62 = scmp.eq.s32.totalorder %s17, 1
      %p63 = por %p61, %p62
      %p65 = scmp.ne.s32.totalorder %s48, %s64
      %p66 = scmp.eq.s32.totalorder %s17, 0
      %p67 = por %p65, %p66
      %s68 = ssub.s32 %s18, %s37
      %s69 = ssub.s32 %s19, %s33
      %s70 = sor.u32 %s68, %s69
      %p71 = scmp.eq.s32.totalorder %s70, 0
      %s73 = sadd.s32 %s72, 1
      %s74 = scalar_select %p71, %s72, %s73
      %p77 = pneg %p71
      %p78 = scmp.eq.s32.totalorder %s11, 1
      %p79 = por %p77, %p78
      %p80 = scmp.ne.s32.totalorder %s72, %s75
      %p81 = scmp.eq.s32.totalorder %s11, 0
      %p82 = por %p80, %p81
      %p83 = scmp.ne.s32.totalorder %s72, %s75
      %p84 = scmp.eq.s32.totalorder %s16, 1
      %p85 = por %p83, %p84
      %p86 = scmp.ne.s32.totalorder %s75, %s76
      %p87 = scmp.eq.s32.totalorder %s16, 0
      %p88 = por %p86, %p87
      %p89 = scmp.ne.s32.totalorder %s75, %s76
      %p90 = scmp.eq.s32.totalorder %s17, 1
      %p91 = por %p89, %p90
      %p93 = scmp.ne.s32.totalorder %s76, %s92
      %p94 = scmp.eq.s32.totalorder %s17, 0
      %p95 = por %p93, %p94
      %p96 = scmp.le.s32.totalorder 1, %s11
      %p97 = scmp.lt.s32.totalorder %s11, 3
      %p98 = pnand %p96, %p97
      %p99 = pneg %p98
      // Predicated region
      $region9: #{tpu_custom_call.1} parent=5 // pred_check
        _
      $region10: #{tpu_custom_call.1} parent=5 // pred_check_branch
        %101 = sbr.rel (%p98) target = $region12
      $region11: #{tpu_custom_call.1} parent=5 // pred_region
        %s102 = ssub.s32 %s11, 1
      $region12: #{tpu_custom_call.1} parent=5 // pred_fallthru
        _
      %p103 = scmp.lt.s32.totalorder %s11, 2
      // Predicated region
      $region13: #{tpu_custom_call.1} parent=5 // pred_check
        %p104 = pneg %p103
      $region14: #{tpu_custom_call.1} parent=5 // pred_check_branch
        %106 = sbr.rel (%p104) target = $region16
      $region15: #{tpu_custom_call.1} parent=5 // pred_region
        // Predicated region
        $region17: #{tpu_custom_call.1} parent=15 // pred_check
          %p107 = pneg %p54
        $region18: #{tpu_custom_call.1} parent=15 // pred_check_branch
          %109 = sbr.rel (%p107) target = $region20
        $region19: #{tpu_custom_call.1} parent=15 // pred_region
          %s110 = sand.u32 %s44, 1
          %s111 = scalar_lea.sflag [#allocation4], %s110
          %s112 = sand.u32 %s44, 1
          %s113 = smul.addr %s112, 128
          %s114 = scalar_lea.vmem [#allocation3], %s113
          %s115 = smul.u32 2, %s18
          %s116 = smul.u32 8, %s19
          %s118 = ssub.s32 2048, 2048
          %119 = vsyncadd %s111, %s118
          %s120 = smul.addr %s116, 2
          %s121 = sadd.s32 %s20, %s120
          %s122 = smul.addr %s115, 16
          %s123 = sadd.s32 %s121, %s122
          %s124 = smul.addr %s123, 128
          %s125 = scalar_lea.hbm %s0, %s124
          %s126 = sshll.u32 %s114, 4
          %s127 = int_to_ptr.vmem [resolvable:$true] %s126
          %132 = dma.hbm_to_vmem [thread:$0]  %s125, 2048, %s127, %s111, 256, 128, 8
        $region20: #{tpu_custom_call.1} parent=15 // pred_fallthru
          _
      $region16: #{tpu_custom_call.1} parent=5 // pred_fallthru
        _
      %p133 = scmp.le.s32.totalorder 1, %s11
      %p134 = scmp.lt.s32.totalorder %s11, 3
      %p135 = pnand %p133, %p134
      %p136 = pneg %p135
      // Predicated region
      $region21: #{tpu_custom_call.1} parent=5 // pred_check
        _
      $region22: #{tpu_custom_call.1} parent=5 // pred_check_branch
        %138 = sbr.rel (%p135) target = $region24
      $region23: #{tpu_custom_call.1} parent=5 // pred_region
        %s139 = ssub.s32 %s11, 1
        %s140 = sand.u32 %s47, 1
        %s141 = scalar_lea.sflag [#allocation4], %s140
        %s142 = sand.u32 %s47, 1
        %s143 = smul.addr %s142, 128
        %s144 = scalar_lea.vmem [#allocation3], %s143
        // Predicated region
        $region25: #{tpu_custom_call.1} parent=23 // pred_check
          %p145 = pneg %p60
        $region26: #{tpu_custom_call.1} parent=23 // pred_check_branch
          %147 = sbr.rel (%p145) target = $region28
        $region27: #{tpu_custom_call.1} parent=23 // pred_region
          %148 = dma.done %s141, 2048
        $region28: #{tpu_custom_call.1} parent=23 // pred_fallthru
          _
        %s149 = sand.u32 %s47, 1
        %s150 = scalar_lea.sflag [#allocation4], %s149
        %s151 = sand.u32 %s47, 1
        %s152 = smul.addr %s151, 128
        %s153 = scalar_lea.vmem [#allocation3], %s152
        %p154 = pneg %p60
        %p155 = pneg %p57
        %p156 = pneg %p88
        %p157 = pneg %p85
        %s158 = smul.u32 2, %s21
        %s159 = smul.u32 8, %s22
        %p160 = scmp.eq.s32.totalorder %s23, 0
        // Predicated region
        $region29: #{tpu_custom_call.1} parent=23 // pred_check
          %p161 = pneg %p160
        $region30: #{tpu_custom_call.1} parent=23 // pred_check_branch
          %163 = sbr.rel (%p161) target = $region32
        $region31: #{tpu_custom_call.1} parent=23 // pred_region
          %vm164 = vcmask 517120
          %165 = vst.msk [vmem:[#allocation6] sm:$0x3] %vm164, 0.0
          %166 = vst.msk [vmem:[#allocation2] sm:$0x3] %vm164, -inf
        $region32: #{tpu_custom_call.1} parent=23 // pred_fallthru
          _
        %v167 = vld [vmem:[%s144] sm:$0xff]
        %v168 = vld [vmem:[%s144 + $0x8] sm:$0xff]
        %v169 = vld [vmem:[%s144 + $0x10] sm:$0xff]
        %v170 = vld [vmem:[%s144 + $0x18] sm:$0xff]
        %v171 = vld [vmem:[%s144 + $0x20] sm:$0xff]
        %v172 = vld [vmem:[%s144 + $0x28] sm:$0xff]
        %v173 = vld [vmem:[%s144 + $0x30] sm:$0xff]
        %v174 = vld [vmem:[%s144 + $0x38] sm:$0xff]
        %v175 = vld [vmem:[%s144 + $0x40] sm:$0xff]
        %v176 = vld [vmem:[%s144 + $0x48] sm:$0xff]
        %v177 = vld [vmem:[%s144 + $0x50] sm:$0xff]
        %v178 = vld [vmem:[%s144 + $0x58] sm:$0xff]
        %v179 = vld [vmem:[%s144 + $0x60] sm:$0xff]
        %v180 = vld [vmem:[%s144 + $0x68] sm:$0xff]
        %v181 = vld [vmem:[%s144 + $0x70] sm:$0xff]
        %v182 = vld [vmem:[%s144 + $0x78] sm:$0xff]
        %v183 = vld [vmem:[#allocation6] sm:$0x3]
        %184 = vadd.xlane.f32.xlu0 %v167
        %v185 = vpop.xlane.xlu0 %184
        %186 = vadd.xlane.f32.xlu0 %v168
        %v187 = vpop.xlane.xlu0 %186
        %188 = vadd.xlane.f32.xlu0 %v169
        %v189 = vpop.xlane.xlu0 %188
        %190 = vadd.xlane.f32.xlu0 %v170
        %v191 = vpop.xlane.xlu0 %190
        %192 = vadd.xlane.f32.xlu0 %v171
        %v193 = vpop.xlane.xlu0 %192
        %194 = vadd.xlane.f32.xlu0 %v172
        %v195 = vpop.xlane.xlu0 %194
        %196 = vadd.xlane.f32.xlu0 %v173
        %v197 = vpop.xlane.xlu0 %196
        %198 = vadd.xlane.f32.xlu0 %v174
        %v199 = vpop.xlane.xlu0 %198
        %200 = vadd.xlane.f32.xlu0 %v175
        %v201 = vpop.xlane.xlu0 %200
        %202 = vadd.xlane.f32.xlu0 %v176
        %v203 = vpop.xlane.xlu0 %202
        %204 = vadd.xlane.f32.xlu0 %v177
        %v205 = vpop.xlane.xlu0 %204
        %206 = vadd.xlane.f32.xlu0 %v178
        %v207 = vpop.xlane.xlu0 %206
        %208 = vadd.xlane.f32.xlu0 %v179
        %v209 = vpop.xlane.xlu0 %208
        %210 = vadd.xlane.f32.xlu0 %v180
        %v211 = vpop.xlane.xlu0 %210
        %212 = vadd.xlane.f32.xlu0 %v181
        %v213 = vpop.xlane.xlu0 %212
        %214 = vadd.xlane.f32.xlu0 %v182
        %v215 = vpop.xlane.xlu0 %214
        %v232 = vlaneseq
        %v233 = vand.u32 %v232, 127
        %v234 = vlaneseq
        %v235 = vshrl.u32 %v234, 7
        %v236 = vsub.s32 %v233, %v235
        %v237 = vrot.slane %v185, %v236
        %v238 = vadd.s32 %v233, 4294967288
        %v239 = vlaneseq
        %v240 = vshrl.u32 %v239, 7
        %v241 = vsub.s32 %v238, %v240
        %v242 = vrot.slane %v187, %v241
        %vm243 = vcmask 130112
        %v244 = vsel %vm243, %v242, %v237
        %v245 = vadd.s32 %v233, 4294967280
        %v246 = vlaneseq
        %v247 = vshrl.u32 %v246, 7
        %v248 = vsub.s32 %v245, %v247
        %v249 = vrot.slane %v189, %v248
        %vm250 = vcmask 195712
        %v251 = vsel %vm250, %v249, %v244
        %v252 = vadd.s32 %v233, 4294967272
        %v253 = vlaneseq
        %v254 = vshrl.u32 %v253, 7
        %v255 = vsub.s32 %v252, %v254
        %v256 = vrot.slane %v191, %v255
        %vm257 = vcmask 261312
        %v258 = vsel %vm257, %v256, %v251
        %v259 = vadd.s32 %v233, 4294967264
        %v260 = vlaneseq
        %v261 = vshrl.u32 %v260, 7
        %v262 = vsub.s32 %v259, %v261
        %v263 = vrot.slane %v193, %v262
        %vm264 = vcmask 326912
        %v265 = vsel %vm264, %v263, %v258
        %v266 = vadd.s32 %v233, 4294967256
        %v267 = vlaneseq
        %v268 = vshrl.u32 %v267, 7
        %v269 = vsub.s32 %v266, %v268
        %v270 = vrot.slane %v195, %v269
        %vm271 = vcmask 392512
        %v272 = vsel %vm271, %v270, %v265
        %v273 = vadd.s32 %v233, 4294967248
        %v274 = vlaneseq
        %v275 = vshrl.u32 %v274, 7
        %v276 = vsub.s32 %v273, %v275
        %v277 = vrot.slane %v197, %v276
        %vm278 = vcmask 458112
        %v279 = vsel %vm278, %v277, %v272
        %v280 = vadd.s32 %v233, 4294967240
        %v281 = vlaneseq
        %v282 = vshrl.u32 %v281, 7
        %v283 = vsub.s32 %v280, %v282
        %v284 = vrot.slane %v199, %v283
        %vm285 = vcmask 523712
        %v286 = vsel %vm285, %v284, %v279
        %v287 = vlaneseq
        %v288 = vshrl.u32 %v287, 7
        %v289 = vsub.s32 %v233, %v288
        %v290 = vrot.slane %v201, %v289
        %v291 = vlaneseq
        %v292 = vshrl.u32 %v291, 7
        %v293 = vsub.s32 %v238, %v292
        %v294 = vrot.slane %v203, %v293
        %v295 = vsel %vm243, %v294, %v290
        %v296 = vlaneseq
        %v297 = vshrl.u32 %v296, 7
        %v298 = vsub.s32 %v245, %v297
        %v299 = vrot.slane %v205, %v298
        %v300 = vsel %vm250, %v299, %v295
        %v301 = vlaneseq
        %v302 = vshrl.u32 %v301, 7
        %v303 = vsub.s32 %v252, %v302
        %v304 = vrot.slane %v207, %v303
        %v305 = vsel %vm257, %v304, %v300
        %v306 = vlaneseq
        %v307 = vshrl.u32 %v306, 7
        %v308 = vsub.s32 %v259, %v307
        %v309 = vrot.slane %v209, %v308
        %v310 = vsel %vm264, %v309, %v305
        %v311 = vlaneseq
        %v312 = vshrl.u32 %v311, 7
        %v313 = vsub.s32 %v266, %v312
        %v314 = vrot.slane %v211, %v313
        %v315 = vsel %vm271, %v314, %v310
        %v316 = vlaneseq
        %v317 = vshrl.u32 %v316, 7
        %v318 = vsub.s32 %v273, %v317
        %v319 = vrot.slane %v213, %v318
        %v320 = vsel %vm278, %v319, %v315
        %v321 = vlaneseq
        %v322 = vshrl.u32 %v321, 7
        %v323 = vsub.s32 %v280, %v322
        %v324 = vrot.slane %v215, %v323
        %v325 = vsel %vm285, %v324, %v320
        %vm326 = vcmask 1041409
        %v327 = vsel %vm326, %v325, %v286
        %v329 = vadd.f32 %v183, %v327
        %vm330 = vcmask 517120
        %331 = vst.msk [vmem:[#allocation6] sm:$0x3] %vm330, %v329
        %v332 = vld [vmem:[#allocation2] sm:$0x3]
        %333 = vmax.xlane.f32.xlu0 %v167
        %v334 = vpop.xlane.xlu0 %333
        %335 = vmax.xlane.f32.xlu0 %v168
        %v336 = vpop.xlane.xlu0 %335
        %337 = vmax.xlane.f32.xlu0 %v169
        %v338 = vpop.xlane.xlu0 %337
        %339 = vmax.xlane.f32.xlu0 %v170
        %v340 = vpop.xlane.xlu0 %339
        %341 = vmax.xlane.f32.xlu0 %v171
        %v342 = vpop.xlane.xlu0 %341
        %343 = vmax.xlane.f32.xlu0 %v172
        %v344 = vpop.xlane.xlu0 %343
        %345 = vmax.xlane.f32.xlu0 %v173
        %v346 = vpop.xlane.xlu0 %345
        %347 = vmax.xlane.f32.xlu0 %v174
        %v348 = vpop.xlane.xlu0 %347
        %349 = vmax.xlane.f32.xlu0 %v175
        %v350 = vpop.xlane.xlu0 %349
        %351 = vmax.xlane.f32.xlu0 %v176
        %v352 = vpop.xlane.xlu0 %351
        %353 = vmax.xlane.f32.xlu0 %v177
        %v354 = vpop.xlane.xlu0 %353
        %355 = vmax.xlane.f32.xlu0 %v178
        %v356 = vpop.xlane.xlu0 %355
        %357 = vmax.xlane.f32.xlu0 %v179
        %v358 = vpop.xlane.xlu0 %357
        %359 = vmax.xlane.f32.xlu0 %v180
        %v360 = vpop.xlane.xlu0 %359
        %361 = vmax.xlane.f32.xlu0 %v181
        %v362 = vpop.xlane.xlu0 %361
        %363 = vmax.xlane.f32.xlu0 %v182
        %v364 = vpop.xlane.xlu0 %363
        %v381 = vlaneseq
        %v382 = vshrl.u32 %v381, 7
        %v383 = vsub.s32 %v233, %v382
        %v384 = vrot.slane %v334, %v383
        %v385 = vlaneseq
        %v386 = vshrl.u32 %v385, 7
        %v387 = vsub.s32 %v238, %v386
        %v388 = vrot.slane %v336, %v387
        %v389 = vsel %vm243, %v388, %v384
        %v390 = vlaneseq
        %v391 = vshrl.u32 %v390, 7
        %v392 = vsub.s32 %v245, %v391
        %v393 = vrot.slane %v338, %v392
        %v394 = vsel %vm250, %v393, %v389
        %v395 = vlaneseq
        %v396 = vshrl.u32 %v395, 7
        %v397 = vsub.s32 %v252, %v396
        %v398 = vrot.slane %v340, %v397
        %v399 = vsel %vm257, %v398, %v394
        %v400 = vlaneseq
        %v401 = vshrl.u32 %v400, 7
        %v402 = vsub.s32 %v259, %v401
        %v403 = vrot.slane %v342, %v402
        %v404 = vsel %vm264, %v403, %v399
        %v405 = vlaneseq
        %v406 = vshrl.u32 %v405, 7
        %v407 = vsub.s32 %v266, %v406
        %v408 = vrot.slane %v344, %v407
        %v409 = vsel %vm271, %v408, %v404
        %v410 = vlaneseq
        %v411 = vshrl.u32 %v410, 7
        %v412 = vsub.s32 %v273, %v411
        %v413 = vrot.slane %v346, %v412
        %v414 = vsel %vm278, %v413, %v409
        %v415 = vlaneseq
        %v416 = vshrl.u32 %v415, 7
        %v417 = vsub.s32 %v280, %v416
        %v418 = vrot.slane %v348, %v417
        %v419 = vsel %vm285, %v418, %v414
        %v420 = vlaneseq
        %v421 = vshrl.u32 %v420, 7
        %v422 = vsub.s32 %v233, %v421
        %v423 = vrot.slane %v350, %v422
        %v424 = vlaneseq
        %v425 = vshrl.u32 %v424, 7
        %v426 = vsub.s32 %v238, %v425
        %v427 = vrot.slane %v352, %v426
        %v428 = vsel %vm243, %v427, %v423
        %v429 = vlaneseq
        %v430 = vshrl.u32 %v429, 7
        %v431 = vsub.s32 %v245, %v430
        %v432 = vrot.slane %v354, %v431
        %v433 = vsel %vm250, %v432, %v428
        %v434 = vlaneseq
        %v435 = vshrl.u32 %v434, 7
        %v436 = vsub.s32 %v252, %v435
        %v437 = vrot.slane %v356, %v436
        %v438 = vsel %vm257, %v437, %v433
        %v439 = vlaneseq
        %v440 = vshrl.u32 %v439, 7
        %v441 = vsub.s32 %v259, %v440
        %v442 = vrot.slane %v358, %v441
        %v443 = vsel %vm264, %v442, %v438
        %v444 = vlaneseq
        %v445 = vshrl.u32 %v444, 7
        %v446 = vsub.s32 %v266, %v445
        %v447 = vrot.slane %v360, %v446
        %v448 = vsel %vm271, %v447, %v443
        %v449 = vlaneseq
        %v450 = vshrl.u32 %v449, 7
        %v451 = vsub.s32 %v273, %v450
        %v452 = vrot.slane %v362, %v451
        %v453 = vsel %vm278, %v452, %v448
        %v454 = vlaneseq
        %v455 = vshrl.u32 %v454, 7
        %v456 = vsub.s32 %v280, %v455
        %v457 = vrot.slane %v364, %v456
        %v458 = vsel %vm285, %v457, %v453
        %v459 = vsel %vm326, %v458, %v419
        %v461 = vmax.f32 %v332, %v459
        %462 = vst.msk [vmem:[#allocation2] sm:$0x3] %vm330, %v461
        %p463 = scmp.eq.s32.totalorder %s23, 1
        // Predicated region
        $region33: #{tpu_custom_call.1} parent=23 // pred_check
          %p464 = pneg %p463
        $region34: #{tpu_custom_call.1} parent=23 // pred_check_branch
          %466 = sbr.rel (%p464) target = $region36
        $region35: #{tpu_custom_call.1} parent=23 // pred_region
          %v467 = vld [vmem:[#allocation6] sm:$0x3]
          %v468 = vmul.f32 %v467, 0.00390625
          %v469 = vld [vmem:[#allocation2] sm:$0x3]
          %v470 = vadd.f32 %v468, %v469
          %471 = vst.msk [vmem:[#allocation6] sm:$0x3] %vm330, %v470
        $region36: #{tpu_custom_call.1} parent=23 // pred_fallthru
          _
        // Predicated region
        $region37: #{tpu_custom_call.1} parent=23 // pred_check
          %p472 = pneg %p85
        $region38: #{tpu_custom_call.1} parent=23 // pred_check_branch
          %474 = sbr.rel (%p472) target = $region40
        $region39: #{tpu_custom_call.1} parent=23 // pred_region
          %s476 = ssub.s32 32, 32
          %477 = vsyncadd [#allocation5], %s476
          %s478 = sadd.s32 %s22, %s21
          %s479 = smul.addr %s478, 32
          %s480 = scalar_lea.hbm %s1, %s479
          %s482 = sshll.u32 [#allocation6], 4
          %s483 = int_to_ptr.vmem [resolvable:$true] %s482
          %485 = dma.vmem_to_hbm [thread:$0]  %s483, 32, %s480, [#allocation5]
        $region40: #{tpu_custom_call.1} parent=23 // pred_fallthru
          _
        // Predicated region
        $region41: #{tpu_custom_call.1} parent=23 // pred_check
          %p486 = pneg %p85
        $region42: #{tpu_custom_call.1} parent=23 // pred_check_branch
          %488 = sbr.rel (%p486) target = $region44
        $region43: #{tpu_custom_call.1} parent=23 // pred_region
          %489 = dma.done [#allocation5], 32
        $region44: #{tpu_custom_call.1} parent=23 // pred_fallthru
          _
      $region24: #{tpu_custom_call.1} parent=5 // pred_fallthru
        _
      %p490 = scmp.le.s32.totalorder 2, %s11
      // Predicated region
      $region45: #{tpu_custom_call.1} parent=5 // pred_check
        %p491 = pneg %p490
      $region46: #{tpu_custom_call.1} parent=5 // pred_check_branch
        %493 = sbr.rel (%p491) target = $region48
      $region47: #{tpu_custom_call.1} parent=5 // pred_region
        %s494 = ssub.s32 %s11, 2
      $region48: #{tpu_custom_call.1} parent=5 // pred_fallthru
        _
    $region6: #{tpu_custom_call.1} parent=1 // loop_footer
      %s15 = sadd.s32 1, %s11
    $region7: #{tpu_custom_call.1} parent=1 // loop_footer_branch
      %10 = sbr.rel target = $region3
    $region8: #{tpu_custom_call.1} parent=1 // loop_exit
      _
    %495 = vsyncpa [#allocation4], 1
    %s496 = scalar_lea.sflag [#allocation4], 1
    %497 = vsyncpa %s496, 1
    %498 = vsyncpa [#allocation5], 1
    %s499 = scalar_lea.sflag [#allocation5], 1
    %500 = vsyncpa %s499, 1

</llo_original>
